<compile_context>
chip_gen: v7x
topology: tpu7x:2x2x1
jax: 0.10.0
libtpu: 0.0.40
codegen_flags: <defaults>
</compile_context>

<pallas_src>
import functools
import math

import jax
import jax.numpy as jnp
from jax.experimental import pallas as pl
from jax.experimental.pallas import tpu as pltpu


def _round_up(x, m):
    return ((x + m - 1) // m) * m


def _vmem_capacity_bytes():
    """Physical VMEM per TensorCore (falls back to the smallest, v7x = 64 MiB)."""
    try:
        return int(pltpu.get_tpu_info().vmem_capacity_bytes)
    except Exception:
        return 64 * 1024 * 1024


# --------------------------------------------------------------------------- #
# Kernel                                                                       #
# --------------------------------------------------------------------------- #
def _ffn_glu_kernel(x_ref, wu_ref, wv_ref, bu_ref, bv_ref, wo_ref, bo_ref,
                    o_ref, *scratch):
    """One (token-tile, d_ff-tile) grid step of the fused GLU FFN.

    x_ref      : (tn, d_model)      activation tile (compute dtype)
    wu/wv_ref  : (d_model, tf)      first-projection tiles (compute dtype)
    bu/bv_ref  : (1, tf)            first-projection biases (f32)
    wo_ref     : (tf, d_out)        second-projection tile
    bo_ref     : (1, d_out)         output bias (f32)
    o_ref      : (tn, d_out)        output tile
    scratch    : () when F == 1, or ((tn, d_out) f32 accumulator,) when F > 1
    """
    x = x_ref[...]
    u = jnp.dot(x, wu_ref[...], preferred_element_type=jnp.float32) + bu_ref[...]
    v = jnp.dot(x, wv_ref[...], preferred_element_type=jnp.float32) + bv_ref[...]
    g = jnp.maximum(u, 0.0) * v                       # ReLU(u) * v, gate kept in f32
    part = jnp.dot(g.astype(wo_ref.dtype), wo_ref[...],
                   preferred_element_type=jnp.float32)

    if not scratch:
        # F == 1: weights resident, write output directly (no acc round-trip).
        o_ref[...] = (part + bo_ref[...]).astype(o_ref.dtype)
    else:
        # F > 1: accumulate over the streamed d_ff grid axis.
        acc_ref, = scratch
        f = pl.program_id(1)

        @pl.when(f == 0)
        def _():
            acc_ref[...] = jnp.zeros_like(acc_ref)

        acc_ref[...] += part

        @pl.when(f == pl.num_programs(1) - 1)
        def _():
            o_ref[...] = (acc_ref[...] + bo_ref[...]).astype(o_ref.dtype)


# --------------------------------------------------------------------------- #
# Tiling selection (generation aware)                                          #
# --------------------------------------------------------------------------- #
def _choose_tiling(N, d_model, d_ff, d_out, isz, out_isz, sublane, budget,
                   tn=None, tf=None):
    def per_step_bytes(tn_, tf_, with_acc):
        b = 2 * tn_ * d_model * isz               # x tile (double buffered)
        b += 2 * 2 * d_model * tf_ * isz          # wu + wv tiles (double buffered)
        b += 2 * tf_ * d_out * isz                # wo tile (double buffered)
        b += 2 * 2 * tf_ * 4 + 2 * d_out * 4      # biases (f32, double buffered)
        b += 2 * tn_ * d_out * out_isz            # output tile (double buffered)
        b += 3 * tn_ * tf_ * 4                    # u / v / g intermediates (f32)
        b += tn_ * d_out * 4                      # second-dot result (f32)
        if with_acc:
            b += tn_ * d_out * 4                  # accumulator scratch
        return b

    if tn is None:
        # >= 2 token tiles when possible so the "parallel" axis can shard
        # across both TensorCores on v7x.
        tn = min(512, _round_up((N + 1) // 2, sublane))
        tn = max(tn, sublane)
    else:
        tn = max(_round_up(tn, sublane), sublane)

    if tf is None:
        if per_step_bytes(tn, d_ff, with_acc=False) <= budget:
            tf = d_ff                             # weights resident (F = 1)
        else:
            cands = sorted({c for c in range(128, d_ff, 128) if d_ff % c == 0},
                           reverse=True)
            # fill the 256x256 MXUs (v6e/v7x) before falling back to 128-multiples
            cands = ([c for c in cands if c % 256 == 0]
                     + [c for c in cands if c % 256 != 0])
            tf = None
            for c in cands:
                if per_step_bytes(tn, c, with_acc=True) <= budget:
                    tf = c
                    break
            if tf is None:
                tf = cands[-1] if cands else d_ff
                while tn > sublane and per_step_bytes(tn, tf, True) > budget:
                    tn = max(_round_up(tn // 2, sublane), sublane)
    else:
        assert d_ff % tf == 0, "d_ff must be divisible by the d_ff tile"

    F = d_ff // tf
    if F > 1 and N >= 1024:
        # Streaming re-fetches weights once per token tile: raise the token
        # tile so arithmetic intensity stays above the HBM roofline (v6e).
        for cand in (1024, 768):
            c = min(_round_up(cand, sublane), _round_up(N, sublane))
            if c > tn and per_step_bytes(c, tf, True) <= budget:
                tn = c
                break

    return tn, tf, F, per_step_bytes(tn, tf, F > 1)


# --------------------------------------------------------------------------- #
# Wrapper                                                                      #
# --------------------------------------------------------------------------- #
def pack_params(wu, wv, bu, bv, wo, bo, compute_dtype):
    """Cast weights to the MXU dtype and biases to f32 (call once at init to
    hoist the casts out of the per-forward path)."""
    cdt = jnp.dtype(compute_dtype)
    return (wu.astype(cdt), wv.astype(cdt),
            bu.reshape(1, -1).astype(jnp.float32),
            bv.reshape(1, -1).astype(jnp.float32),
            wo.astype(cdt),
            bo.reshape(1, -1).astype(jnp.float32))


def feed_forward_glu(x, wu, wv, bu, bv, wo, bo, *, tn=None, tf=None,
                     compute_dtype=None):
    """x: (B, S, d_model) -> (B, S, d_out).

    compute_dtype: MXU input dtype.  Default: bf16 when x is f32 (f32
        accumulation is always used), otherwise x.dtype.
    tn: token tile (rows per grid step); auto-selected if None.
    tf: d_ff tile; auto-selected if None (weights resident when they fit VMEM,
        otherwise streamed over a second grid axis with an f32 accumulator).
    """
    B, S, d_model = x.shape
    d_ff = wu.shape[1]
    d_out = wo.shape[1]
    out_dtype = x.dtype

    if compute_dtype is None:
        cdt = jnp.dtype(jnp.bfloat16) if x.dtype == jnp.float32 else jnp.dtype(x.dtype)
    else:
        cdt = jnp.dtype(compute_dtype)
    isz = cdt.itemsize
    out_isz = jnp.dtype(out_dtype).itemsize
    sublane = 32 // isz                       # 8 for f32, 16 for bf16

    N = B * S

    # --- generation-aware VMEM budget --------------------------------------
    cap = _vmem_capacity_bytes()              # 64 MiB on v7x, 128 MiB on v5e/v6e
    budget = int(0.70 * max(cap - 8 * 1024 * 1024, 16 * 1024 * 1024))

    tn, tf, F, per_step = _choose_tiling(
        N, d_model, d_ff, d_out, isz, out_isz, sublane, budget, tn=tn, tf=tf)

    vmem_limit = max(32 * 1024 * 1024, int(1.3 * per_step), per_step + (2 << 20))
    vmem_limit = min(vmem_limit, cap - 4 * 1024 * 1024)

    # --- host-side prep (casts only; pre-pack via pack_params in production) -
    x2 = x.reshape(N, d_model).astype(cdt)    # free reshape + (cheap) cast
    wu_c, wv_c, bu2, bv2, wo_c, bo2 = pack_params(wu, wv, bu, bv, wo, bo, cdt)

    n_tiles = pl.cdiv(N, tn)
    grid = (n_tiles, F)

    # --- cost estimate (accounts for weight re-streaming when F > 1) --------
    flops = 2 * N * d_model * (2 * d_ff) + 2 * N * d_ff * d_out
    weight_bytes = (wu_c.size + wv_c.size + wo_c.size) * isz \
        + (bu2.size + bv2.size + bo2.size) * 4
    bytes_accessed = (N * d_model * isz
                      + weight_bytes * (1 if F == 1 else n_tiles)
                      + N * d_out * out_isz)

    scratch_shapes = [pltpu.VMEM((tn, d_out), jnp.float32)] if F > 1 else []

    out2 = pl.pallas_call(
        _ffn_glu_kernel,
        out_shape=jax.ShapeDtypeStruct((N, d_out), out_dtype),
        grid_spec=pltpu.PrefetchScalarGridSpec(
            num_scalar_prefetch=0,
            grid=grid,
            in_specs=[
                pl.BlockSpec((tn, d_model), lambda i, f: (i, 0)),   # x tile
                pl.BlockSpec((d_model, tf), lambda i, f: (0, f)),   # Wu tile
                pl.BlockSpec((d_model, tf), lambda i, f: (0, f)),   # Wv tile
                pl.BlockSpec((1, tf), lambda i, f: (0, f)),         # bu tile
                pl.BlockSpec((1, tf), lambda i, f: (0, f)),         # bv tile
                pl.BlockSpec((tf, d_out), lambda i, f: (f, 0)),     # Wo tile
                pl.BlockSpec((1, d_out), lambda i, f: (0, 0)),      # bo
            ],
            out_specs=pl.BlockSpec((tn, d_out), lambda i, f: (i, 0)),
            scratch_shapes=scratch_shapes,
        ),
        compiler_params=pltpu.CompilerParams(
            dimension_semantics=("parallel", "arbitrary"),
            vmem_limit_bytes=int(vmem_limit),
        ),
        cost_estimate=pl.CostEstimate(
            flops=int(flops), transcendentals=0,
            bytes_accessed=int(bytes_accessed)),
    )(x2, wu_c, wv_c, bu2, bv2, wo_c, bo2)

    return out2.reshape(B, S, d_out)


# --------------------------------------------------------------------------- #
# Init + references                                                            #
# --------------------------------------------------------------------------- #
def init_params(key, d_model, d_ff, d_out, gain=1.0, dtype=jnp.float32):
    """Parameter init mimicking the PyTorch module (xavier_normal weights,
    uniform(-1/sqrt(fan_in)) biases).  Weights stored transposed (in, out)."""
    k1, k2, k3, k4 = jax.random.split(key, 4)

    std_in = gain * math.sqrt(2.0 / (d_model + 2 * d_ff))
    win_w = std_in * jax.random.normal(k1, (d_model, 2 * d_ff), dtype)
    bound_in = 1.0 / math.sqrt(d_model)
    win_b = jax.random.uniform(k2, (2 * d_ff,), dtype, -bound_in, bound_in)

    std_out = gain * math.sqrt(2.0 / (d_ff + d_out))
    wout_w = std_out * jax.random.normal(k3, (d_ff, d_out), dtype)
    bound_out = 1.0 / math.sqrt(d_ff)
    wout_b = jax.random.uniform(k4, (d_out,), dtype, -bound_out, bound_out)

    wu, wv = win_w[:, :d_ff], win_w[:, d_ff:]
    bu, bv = win_b[:d_ff], win_b[d_ff:]
    return wu, wv, bu, bv, wout_w, wout_b


def reference_glu(x, wu, wv, bu, bv, wo, bo):
    u = x @ wu + bu
    v = x @ wv + bv
    g = jnp.maximum(u, 0.0) * v
    return g @ wo + bo


def reference_glu_bf16(x, wu, wv, bu, bv, wo, bo):
    """Reference mirroring the bf16-MXU / f32-accumulation path of the kernel."""
    bf = jnp.bfloat16
    xb = x.astype(bf)
    u = jnp.dot(xb, wu.astype(bf), preferred_element_type=jnp.float32) + bu
    v = jnp.dot(xb, wv.astype(bf), preferred_element_type=jnp.float32) + bv
    g = jnp.maximum(u, 0.0) * v
    out = jnp.dot(g.astype(bf), wo.astype(bf),
                  preferred_element_type=jnp.float32) + bo
    return out.astype(x.dtype)


if __name__ == "__main__":
    B, S = 2, 8
    d_model, d_ff, d_out = 128, 256, 128        # lane-aligned small demo shapes

    key = jax.random.PRNGKey(0)
    kx, kp = jax.random.split(key)
    x = jax.random.normal(kx, (B, S, d_model), jnp.float32)
    params = init_params(kp, d_model, d_ff, d_out)

    ref_f32 = reference_glu(x, *params)
    ref_b16 = reference_glu_bf16(x, *params)

    # 1) default path: bf16 MXU inputs with f32 accumulation.
    out_default = jax.block_until_ready(feed_forward_glu(x, *params))
    assert out_default.shape == (B, S, d_out)
    assert jnp.allclose(out_default, ref_b16, atol=1e-2, rtol=1e-2), \
        "bf16 mismatch vs bf16-matched reference"
    assert jnp.allclose(out_default, ref_f32, atol=1e-1, rtol=1e-1), \
        "bf16 mismatch vs f32 reference"

    # 2) explicit f32 MXU path, weights resident (single d_ff tile).
    out_f32 = jax.block_until_ready(
        feed_forward_glu(x, *params, compute_dtype=jnp.float32))
    assert jnp.allclose(out_f32, ref_f32, atol=1e-4, rtol=1e-4), \
        "f32 mismatch vs reference"

    # 3) d_ff-streaming path (accumulator across the d_ff grid axis).
    out_tiled = jax.block_until_ready(
        feed_forward_glu(x, *params, tf=128, compute_dtype=jnp.float32))
    assert jnp.allclose(out_tiled, ref_f32, atol=1e-4, rtol=1e-4), \
        "tiled mismatch vs reference"

    print("KERNEL_OK")
</pallas_src>

<mosaic_0001>
module attributes {stable_mosaic.version = 11 : i64} {
  func.func @_ffn_glu_kernel(%arg0: i32, %arg1: i32, %arg2: memref<16x128xbf16, #tpu.memory_space<vmem>>, %arg3: memref<128x256xbf16, #tpu.memory_space<vmem>>, %arg4: memref<128x256xbf16, #tpu.memory_space<vmem>>, %arg5: memref<1x256xf32, #tpu.memory_space<vmem>>, %arg6: memref<1x256xf32, #tpu.memory_space<vmem>>, %arg7: memref<256x128xbf16, #tpu.memory_space<vmem>>, %arg8: memref<1x128xf32, #tpu.memory_space<vmem>>, %arg9: memref<16x128xf32, #tpu.memory_space<vmem>>) attributes {dimension_semantics = [#tpu.dimension_semantics<parallel>, #tpu.dimension_semantics<arbitrary>], iteration_bounds = array<i64: 1, 1>, scalar_prefetch = 0 : i64, scratch_operands = 0 : i64, tpu.core_type = #tpu.core_type<tc>, window_params = [{transform_indices = @transform_0, window_bounds = array<i64: 16, 128>}, {transform_indices = @transform_1, window_bounds = array<i64: 128, 256>}, {transform_indices = @transform_2, window_bounds = array<i64: 128, 256>}, {transform_indices = @transform_3, window_bounds = array<i64: 1, 256>}, {transform_indices = @transform_4, window_bounds = array<i64: 1, 256>}, {transform_indices = @transform_5, window_bounds = array<i64: 256, 128>}, {pipeline_mode = #tpu.pipeline_mode<synchronous>, transform_indices = @transform_6, window_bounds = array<i64: 1, 128>}, {transform_indices = @transform_7, window_bounds = array<i64: 16, 128>}]} {
    %c0 = arith.constant 0 : index
    %c0_0 = arith.constant 0 : index
    %0 = vector.load %arg2[%c0, %c0_0] : memref<16x128xbf16, #tpu.memory_space<vmem>>, vector<16x128xbf16>
    %c0_1 = arith.constant 0 : index
    %c0_2 = arith.constant 0 : index
    %1 = vector.load %arg3[%c0_1, %c0_2] : memref<128x256xbf16, #tpu.memory_space<vmem>>, vector<128x256xbf16>
    %cst = arith.constant dense<0.000000e+00> : vector<16x256xf32>
    %2 = tpu.matmul %0, %1, %cst {dimension_numbers = #tpu.dot_dimension_numbers<[1], [0], [0], [1], [0, 0, 1, 1], [], []>} : vector<16x128xbf16>, vector<128x256xbf16>, vector<16x256xf32> -> vector<16x256xf32>
    %c0_3 = arith.constant 0 : index
    %c0_4 = arith.constant 0 : index
    %3 = vector.load %arg5[%c0_3, %c0_4] : memref<1x256xf32, #tpu.memory_space<vmem>>, vector<1x256xf32>
    %4 = vector.broadcast %3 : vector<1x256xf32> to vector<16x256xf32>
    %5 = arith.addf %2, %4 : vector<16x256xf32>
    %c0_5 = arith.constant 0 : index
    %c0_6 = arith.constant 0 : index
    %6 = vector.load %arg4[%c0_5, %c0_6] : memref<128x256xbf16, #tpu.memory_space<vmem>>, vector<128x256xbf16>
    %cst_7 = arith.constant dense<0.000000e+00> : vector<16x256xf32>
    %7 = tpu.matmul %0, %6, %cst_7 {dimension_numbers = #tpu.dot_dimension_numbers<[1], [0], [0], [1], [0, 0, 1, 1], [], []>} : vector<16x128xbf16>, vector<128x256xbf16>, vector<16x256xf32> -> vector<16x256xf32>
    %c0_8 = arith.constant 0 : index
    %c0_9 = arith.constant 0 : index
    %8 = vector.load %arg6[%c0_8, %c0_9] : memref<1x256xf32, #tpu.memory_space<vmem>>, vector<1x256xf32>
    %9 = vector.broadcast %8 : vector<1x256xf32> to vector<16x256xf32>
    %10 = arith.addf %7, %9 : vector<16x256xf32>
    %cst_10 = arith.constant 0.000000e+00 : f32
    %11 = vector.broadcast %cst_10 : f32 to vector<16x256xf32>
    %12 = arith.maximumf %5, %11 : vector<16x256xf32>
    %13 = arith.mulf %12, %10 : vector<16x256xf32>
    %14 = arith.truncf %13 : vector<16x256xf32> to vector<16x256xbf16>
    %c0_11 = arith.constant 0 : index
    %c0_12 = arith.constant 0 : index
    %15 = vector.load %arg7[%c0_11, %c0_12] : memref<256x128xbf16, #tpu.memory_space<vmem>>, vector<256x128xbf16>
    %cst_13 = arith.constant dense<0.000000e+00> : vector<16x128xf32>
    %16 = tpu.matmul %14, %15, %cst_13 {dimension_numbers = #tpu.dot_dimension_numbers<[1], [0], [0], [1], [0, 0, 1, 1], [], []>} : vector<16x256xbf16>, vector<256x128xbf16>, vector<16x128xf32> -> vector<16x128xf32>
    %c0_14 = arith.constant 0 : index
    %c0_15 = arith.constant 0 : index
    %17 = vector.load %arg8[%c0_14, %c0_15] : memref<1x128xf32, #tpu.memory_space<vmem>>, vector<1x128xf32>
    %18 = vector.broadcast %17 : vector<1x128xf32> to vector<16x128xf32>
    %19 = arith.addf %16, %18 : vector<16x128xf32>
    %c0_16 = arith.constant 0 : index
    %c0_17 = arith.constant 0 : index
    %20 = vector.load %arg9[%c0_16, %c0_17] : memref<16x128xf32, #tpu.memory_space<vmem>>, vector<16x128xf32>
    tpu.vector_store %arg9[%c0_16, %c0_17], %19 {strides = array<i32>} : memref<16x128xf32, #tpu.memory_space<vmem>>, vector<16x128xf32>,
    return
  }
  func.func @transform_0(%arg0: i32, %arg1: i32) -> (i32, i32) {
    %c0_i32 = arith.constant 0 : i32
    %c0_i32_0 = arith.constant 0 : i32
    return %arg0, %c0_i32 : i32, i32
  }
  func.func @transform_1(%arg0: i32, %arg1: i32) -> (i32, i32) {
    %c0_i32 = arith.constant 0 : i32
    %c0_i32_0 = arith.constant 0 : i32
    return %c0_i32, %arg1 : i32, i32
  }
  func.func @transform_2(%arg0: i32, %arg1: i32) -> (i32, i32) {
    %c0_i32 = arith.constant 0 : i32
    %c0_i32_0 = arith.constant 0 : i32
    return %c0_i32, %arg1 : i32, i32
  }
  func.func @transform_3(%arg0: i32, %arg1: i32) -> (i32, i32) {
    %c0_i32 = arith.constant 0 : i32
    %c0_i32_0 = arith.constant 0 : i32
    return %c0_i32, %arg1 : i32, i32
  }
  func.func @transform_4(%arg0: i32, %arg1: i32) -> (i32, i32) {
    %c0_i32 = arith.constant 0 : i32
    %c0_i32_0 = arith.constant 0 : i32
    return %c0_i32, %arg1 : i32, i32
  }
  func.func @transform_5(%arg0: i32, %arg1: i32) -> (i32, i32) {
    %c0_i32 = arith.constant 0 : i32
    %c0_i32_0 = arith.constant 0 : i32
    return %arg1, %c0_i32 : i32, i32
  }
  func.func @transform_6(%arg0: i32, %arg1: i32) -> (i32, i32) {
    %c0_i32 = arith.constant 0 : i32
    %c0_i32_0 = arith.constant 0 : i32
    %c0_i32_1 = arith.constant 0 : i32
    return %c0_i32, %c0_i32_0 : i32, i32
  }
  func.func @transform_7(%arg0: i32, %arg1: i32) -> (i32, i32) {
    %c0_i32 = arith.constant 0 : i32
    %c0_i32_0 = arith.constant 0 : i32
    return %arg0, %c0_i32 : i32, i32
  }
}

</mosaic_0001>

<llo_original>
// kernel: tpu_custom_call.1
$region0: #{tpu_custom_call.1}
  #allocation0 [shape = 'u32[]', space=smem, size = 0x4, offset = 0x4, fixed_abs, tag = 'smem constant byte address 0x4 - core index']
  #allocation1 [shape = 'u32[144,128]{1,0:T(1,128)}', space=vmem, size = 0x12000, scoped, tag = 'internal scratch']
  %s0 = inlined_call_operand.hbm [shape: bf16[16,128], index: 0, kind: input, shape index: {}]
  %s1 = inlined_call_operand.hbm [shape: bf16[128,256], index: 1, kind: input, shape index: {}]
  %s2 = inlined_call_operand.hbm [shape: bf16[128,256], index: 2, kind: input, shape index: {}]
  %s3 = inlined_call_operand.vmem [shape: f32[1,256], index: 3, kind: input, shape index: {}]
  %s4 = inlined_call_operand.vmem [shape: f32[1,256], index: 4, kind: input, shape index: {}]
  %s5 = inlined_call_operand.hbm [shape: bf16[256,128], index: 5, kind: input, shape index: {}]
  %s6 = inlined_call_operand.vmem [shape: f32[1,128], index: 6, kind: input, shape index: {}]
  %s7 = inlined_call_operand.hbm [shape: f32[16,128], index: 7, kind: output, shape index: {}]
  %s8 = sld [smem:[#allocation0]]
  $region54: #{tpu_custom_call.1} parent=0
    _
  %s10 = ssub.s32 1, %s8
  %s11 = scalar_select 0, %s10, %s8
  $region1: #{tpu_custom_call.1} parent=0
    #allocation2 [shape = 'u8[4096]{0}', space=vmem, size = 0x1000, scoped, tag = 'input window, operand 0, single buffered']
    #allocation3 [shape = 's32[1]{0}', space=sflag, size = 0x4, scoped, tag = 'scoped memory for tpu_custom_call.1']
    #allocation4 [shape = 's32[1]{0}', space=sflag, size = 0x4, scoped, tag = 'scoped memory for tpu_custom_call.1']
    #allocation5 [shape = 'u8[65536]{0}', space=vmem, size = 0x10000, scoped, tag = 'input window, operand 1, single buffered']
    #allocation6 [shape = 's32[1]{0}', space=sflag, size = 0x4, scoped, tag = 'scoped memory for tpu_custom_call.1']
    #allocation7 [shape = 'u8[65536]{0}', space=vmem, size = 0x10000, scoped, tag = 'input window, operand 2, single buffered']
    #allocation8 [shape = 'u8[65536]{0}', space=vmem, size = 0x10000, scoped, tag = 'input window, operand 5, single buffered']
    #allocation9 [shape = 's32[1]{0}', space=sflag, size = 0x4, scoped, tag = 'scoped memory for tpu_custom_call.1']
    #allocation10 [shape = 'u8[8192]{0}', space=vmem, size = 0x2000, scoped, tag = 'output window, operand 0, single buffered']
    %12 = vsyncpa [#allocation3], 0
    %13 = vsyncpa [#allocation6], 0
    %14 = vsyncpa [#allocation9], 0
    %15 = vsyncpa [#allocation4], 0
    // Predicated region
    $region2: #{tpu_custom_call.1} parent=1 // pred_check
      _
    $region3: #{tpu_custom_call.1} parent=1 // pred_check_branch
      %17 = sbr.rel (0) target = $region5
    $region4: #{tpu_custom_call.1} parent=1 // pred_region
      %s19 = ssub.s32 128, 128
      %20 = vsyncadd [#allocation3], %s19
      %s21 = sshll.u32 [#allocation2], 4
      %s22 = int_to_ptr.vmem [resolvable:$true] %s21
      %27 = dma.hbm_to_vmem [thread:$0]  %s0, 128, %s22, [#allocation3], 64, 64, 4
    $region5: #{tpu_custom_call.1} parent=1 // pred_fallthru
      _
    // Predicated region
    $region6: #{tpu_custom_call.1} parent=1 // pred_check
      _
    $region7: #{tpu_custom_call.1} parent=1 // pred_check_branch
      %29 = sbr.rel (0) target = $region9
    $region8: #{tpu_custom_call.1} parent=1 // pred_region
      %s31 = ssub.s32 2048, 2048
      %32 = vsyncadd [#allocation6], %s31
      %s33 = sshll.u32 [#allocation5], 4
      %s34 = int_to_ptr.vmem [resolvable:$true] %s33
      %39 = dma.hbm_to_vmem [thread:$0]  %s1, 2048, %s34, [#allocation6], 128, 128, 8
    $region9: #{tpu_custom_call.1} parent=1 // pred_fallthru
      _
    // Predicated region
    $region10: #{tpu_custom_call.1} parent=1 // pred_check
      _
    $region11: #{tpu_custom_call.1} parent=1 // pred_check_branch
      %41 = sbr.rel (0) target = $region13
    $region12: #{tpu_custom_call.1} parent=1 // pred_region
      %s43 = ssub.s32 2048, 2048
      %44 = vsyncadd [#allocation6], %s43
      %s45 = sshll.u32 [#allocation7], 4
      %s46 = int_to_ptr.vmem [resolvable:$true] %s45
      %51 = dma.hbm_to_vmem [thread:$0]  %s2, 2048, %s46, [#allocation6], 128, 128, 8
    $region13: #{tpu_custom_call.1} parent=1 // pred_fallthru
      _
    // Predicated region
    $region14: #{tpu_custom_call.1} parent=1 // pred_check
      _
    $region15: #{tpu_custom_call.1} parent=1 // pred_check_branch
      %53 = sbr.rel (0) target = $region17
    $region16: #{tpu_custom_call.1} parent=1 // pred_region
      _
    $region17: #{tpu_custom_call.1} parent=1 // pred_fallthru
      _
    // Predicated region
    $region18: #{tpu_custom_call.1} parent=1 // pred_check
      _
    $region19: #{tpu_custom_call.1} parent=1 // pred_check_branch
      %55 = sbr.rel (0) target = $region21
    $region20: #{tpu_custom_call.1} parent=1 // pred_region
      _
    $region21: #{tpu_custom_call.1} parent=1 // pred_fallthru
      _
    // Predicated region
    $region22: #{tpu_custom_call.1} parent=1 // pred_check
      _
    $region23: #{tpu_custom_call.1} parent=1 // pred_check_branch
      %57 = sbr.rel (0) target = $region25
    $region24: #{tpu_custom_call.1} parent=1 // pred_region
      %s59 = ssub.s32 2048, 2048
      %60 = vsyncadd [#allocation9], %s59
      %s61 = sshll.u32 [#allocation8], 4
      %s62 = int_to_ptr.vmem [resolvable:$true] %s61
      %67 = dma.hbm_to_vmem [thread:$0]  %s5, 2048, %s62, [#allocation9], 64, 64, 4
    $region25: #{tpu_custom_call.1} parent=1 // pred_fallthru
      _
    // Predicated region
    $region26: #{tpu_custom_call.1} parent=1 // pred_check
      _
    $region27: #{tpu_custom_call.1} parent=1 // pred_check_branch
      %69 = sbr.rel (0) target = $region29
    $region28: #{tpu_custom_call.1} parent=1 // pred_region
      _
    $region29: #{tpu_custom_call.1} parent=1 // pred_fallthru
      _
    // Predicated region
    $region30: #{tpu_custom_call.1} parent=1 // pred_check
      _
    $region31: #{tpu_custom_call.1} parent=1 // pred_check_branch
      %71 = sbr.rel (0) target = $region33
    $region32: #{tpu_custom_call.1} parent=1 // pred_region
      %72 = dma.done [#allocation3], 128
    $region33: #{tpu_custom_call.1} parent=1 // pred_fallthru
      _
    // Predicated region
    $region34: #{tpu_custom_call.1} parent=1 // pred_check
      _
    $region35: #{tpu_custom_call.1} parent=1 // pred_check_branch
      %74 = sbr.rel (0) target = $region37
    $region36: #{tpu_custom_call.1} parent=1 // pred_region
      %75 = dma.done [#allocation6], 2048
    $region37: #{tpu_custom_call.1} parent=1 // pred_fallthru
      _
    // Predicated region
    $region38: #{tpu_custom_call.1} parent=1 // pred_check
      _
    $region39: #{tpu_custom_call.1} parent=1 // pred_check_branch
      %77 = sbr.rel (0) target = $region41
    $region40: #{tpu_custom_call.1} parent=1 // pred_region
      %78 = dma.done [#allocation6], 2048
    $region41: #{tpu_custom_call.1} parent=1 // pred_fallthru
      _
    // Predicated region
    $region42: #{tpu_custom_call.1} parent=1 // pred_check
      _
    $region43: #{tpu_custom_call.1} parent=1 // pred_check_branch
      %80 = sbr.rel (0) target = $region45
    $region44: #{tpu_custom_call.1} parent=1 // pred_region
      %81 = dma.done [#allocation9], 2048
    $region45: #{tpu_custom_call.1} parent=1 // pred_fallthru
      _
    %v83 = vld [vmem:[#allocation2] sm:$0xf]
    %v84 = vld [vmem:[#allocation2 + $0x4] sm:$0xf]
    %v85 = vld [vmem:[#allocation5] sm:$0xff]
    %v86 = vld [vmem:[#allocation5 + $0x8] sm:$0xff]
    %v87 = vld [vmem:[#allocation5 + $0x10] sm:$0xff]
    %v88 = vld [vmem:[#allocation5 + $0x18] sm:$0xff]
    %v89 = vld [vmem:[#allocation5 + $0x20] sm:$0xff]
    %v90 = vld [vmem:[#allocation5 + $0x28] sm:$0xff]
    %v91 = vld [vmem:[#allocation5 + $0x30] sm:$0xff]
    %v92 = vld [vmem:[#allocation5 + $0x38] sm:$0xff]
    %v93 = vld [vmem:[#allocation5 + $0x40] sm:$0xff]
    %v94 = vld [vmem:[#allocation5 + $0x48] sm:$0xff]
    %v95 = vld [vmem:[#allocation5 + $0x50] sm:$0xff]
    %v96 = vld [vmem:[#allocation5 + $0x58] sm:$0xff]
    %v97 = vld [vmem:[#allocation5 + $0x60] sm:$0xff]
    %v98 = vld [vmem:[#allocation5 + $0x68] sm:$0xff]
    %v99 = vld [vmem:[#allocation5 + $0x70] sm:$0xff]
    %v100 = vld [vmem:[#allocation5 + $0x78] sm:$0xff]
    %v101 = vld [vmem:[%s3] sm:$0x3]
    %v103 = vlaneseq
    %v104 = vshrl.u32 %v103, 7
    %v105 = vsub.s32 0, %v104
    %v106 = vrot.slane %v101, %v105
    %v107 = vlaneseq
    %v108 = vshrl.u32 %v107, 7
    %v109 = vsub.s32 1, %v108
    %v110 = vrot.slane %v101, %v109
    %v115 = vunpack.c.l.b16 %v83
    %v116 = vunpack.c.l.b16 %v84
    %v117 = vpack.c.b16 %v116, %v115
    %v135 = vunpack.c.l.b16 %v85
    %v136 = vunpack.c.h.b16 %v85
    %v137 = vunpack.c.l.b16 %v86
    %v138 = vunpack.c.h.b16 %v86
    %v139 = vunpack.c.l.b16 %v87
    %v140 = vunpack.c.h.b16 %v87
    %v141 = vunpack.c.l.b16 %v88
    %v142 = vunpack.c.h.b16 %v88
    %v143 = vunpack.c.l.b16 %v89
    %v144 = vunpack.c.h.b16 %v89
    %v145 = vunpack.c.l.b16 %v90
    %v146 = vunpack.c.h.b16 %v90
    %v147 = vunpack.c.l.b16 %v91
    %v148 = vunpack.c.h.b16 %v91
    %v149 = vunpack.c.l.b16 %v92
    %v150 = vunpack.c.h.b16 %v92
    %v151 = vunpack.c.l.b16 %v93
    %v152 = vunpack.c.h.b16 %v93
    %v153 = vunpack.c.l.b16 %v94
    %v154 = vunpack.c.h.b16 %v94
    %v155 = vunpack.c.l.b16 %v95
    %v156 = vunpack.c.h.b16 %v95
    %v157 = vunpack.c.l.b16 %v96
    %v158 = vunpack.c.h.b16 %v96
    %v159 = vunpack.c.l.b16 %v97
    %v160 = vunpack.c.h.b16 %v97
    %v161 = vunpack.c.l.b16 %v98
    %v162 = vunpack.c.h.b16 %v98
    %v163 = vunpack.c.l.b16 %v99
    %v164 = vunpack.c.h.b16 %v99
    %v165 = vunpack.c.l.b16 %v100
    %v166 = vunpack.c.h.b16 %v100
    %v167 = vpack.c.b16 %v137, %v135
    %v168 = vpack.c.b16 %v138, %v136
    %v169 = vpack.c.b16 %v141, %v139
    %v170 = vpack.c.b16 %v142, %v140
    %v171 = vpack.c.b16 %v145, %v143
    %v172 = vpack.c.b16 %v146, %v144
    %v173 = vpack.c.b16 %v149, %v147
    %v174 = vpack.c.b16 %v150, %v148
    %v175 = vpack.c.b16 %v153, %v151
    %v176 = vpack.c.b16 %v154, %v152
    %v177 = vpack.c.b16 %v157, %v155
    %v178 = vpack.c.b16 %v158, %v156
    %v179 = vpack.c.b16 %v161, %v159
    %v180 = vpack.c.b16 %v162, %v160
    %v181 = vpack.c.b16 %v165, %v163
    %v182 = vpack.c.b16 %v166, %v164
    %199 = vmatprep.subr.bf16.mxu0 %v168
    %200 = vmatpush1.bf16.msra.mxu0 %v167
    %201 = vmatprep.subr.bf16.mxu0 %v170
    %202 = vmatpush1.bf16.msra.mxu0 %v169
    %203 = vmatprep.subr.bf16.mxu0 %v172
    %204 = vmatpush1.bf16.msra.mxu0 %v171
    %205 = vmatprep.subr.bf16.mxu0 %v174
    %206 = vmatpush1.bf16.msra.mxu0 %v173
    %207 = vmatprep.subr.bf16.mxu0 %v176
    %208 = vmatpush1.bf16.msra.mxu0 %v175
    %209 = vmatprep.subr.bf16.mxu0 %v178
    %210 = vmatpush1.bf16.msra.mxu0 %v177
    %211 = vmatprep.subr.bf16.mxu0 %v180
    %212 = vmatpush1.bf16.msra.mxu0 %v179
    %213 = vmatprep.subr.bf16.mxu0 %v182
    %214 = vmatpush1.bf16.msra.mxu0 %v181
    %215 = vmatprep.subr.bf16.mxu0 0
    %216 = vmatpush1.bf16.msra.mxu0 0
    %217 = vmatprep.subr.bf16.mxu0 0
    %218 = vmatpush1.bf16.msra.mxu0 0
    %219 = vmatprep.subr.bf16.mxu0 0
    %220 = vmatpush1.bf16.msra.mxu0 0
    %221 = vmatprep.subr.bf16.mxu0 0
    %222 = vmatpush1.bf16.msra.mxu0 0
    %223 = vmatprep.subr.bf16.mxu0 0
    %224 = vmatpush1.bf16.msra.mxu0 0
    %225 = vmatprep.subr.bf16.mxu0 0
    %226 = vmatpush1.bf16.msra.mxu0 0
    %227 = vmatprep.subr.bf16.mxu0 0
    %228 = vmatpush1.bf16.msra.mxu0 0
    %229 = vmatprep.subr.bf16.mxu0 0
    %230 = vmatpush1.bf16.msra.mxu0 0
    %231 = vmatprep.mubr.bf16.mxu0 0
    %232 = vmatmul.mubr.bf16.gmra.mrb[0].mxu0 %v117
    %v233 = vpop.f32.mrb[0].mxu0
    %v234 = vadd.f32 %v106, %v233
    %v235 = vpop.f32.mrb[0].mxu0
    %v236 = vadd.f32 %v110, %v235
    %v237 = vpop.f32.mrb[0].mxu0
    %v238 = vadd.f32 %v106, %v237
    %v239 = vpop.f32.mrb[0].mxu0
    %v240 = vadd.f32 %v110, %v239
    %241 = vdwg.mxu0
    %v242 = vld [vmem:[#allocation7] sm:$0xff]
    %v243 = vld [vmem:[#allocation7 + $0x8] sm:$0xff]
    %v244 = vld [vmem:[#allocation7 + $0x10] sm:$0xff]
    %v245 = vld [vmem:[#allocation7 + $0x18] sm:$0xff]
    %v246 = vld [vmem:[#allocation7 + $0x20] sm:$0xff]
    %v247 = vld [vmem:[#allocation7 + $0x28] sm:$0xff]
    %v248 = vld [vmem:[#allocation7 + $0x30] sm:$0xff]
    %v249 = vld [vmem:[#allocation7 + $0x38] sm:$0xff]
    %v250 = vld [vmem:[#allocation7 + $0x40] sm:$0xff]
    %v251 = vld [vmem:[#allocation7 + $0x48] sm:$0xff]
    %v252 = vld [vmem:[#allocation7 + $0x50] sm:$0xff]
    %v253 = vld [vmem:[#allocation7 + $0x58] sm:$0xff]
    %v254 = vld [vmem:[#allocation7 + $0x60] sm:$0xff]
    %v255 = vld [vmem:[#allocation7 + $0x68] sm:$0xff]
    %v256 = vld [vmem:[#allocation7 + $0x70] sm:$0xff]
    %v257 = vld [vmem:[#allocation7 + $0x78] sm:$0xff]
    %v258 = vld [vmem:[%s4] sm:$0x3]
    %v260 = vlaneseq
    %v261 = vshrl.u32 %v260, 7
    %v262 = vsub.s32 0, %v261
    %v263 = vrot.slane %v258, %v262
    %v264 = vlaneseq
    %v265 = vshrl.u32 %v264, 7
    %v266 = vsub.s32 1, %v265
    %v267 = vrot.slane %v258, %v266
    %v286 = vunpack.c.l.b16 %v242
    %v287 = vunpack.c.h.b16 %v242
    %v288 = vunpack.c.l.b16 %v243
    %v289 = vunpack.c.h.b16 %v243
    %v290 = vunpack.c.l.b16 %v244
    %v291 = vunpack.c.h.b16 %v244
    %v292 = vunpack.c.l.b16 %v245
    %v293 = vunpack.c.h.b16 %v245
    %v294 = vunpack.c.l.b16 %v246
    %v295 = vunpack.c.h.b16 %v246
    %v296 = vunpack.c.l.b16 %v247
    %v297 = vunpack.c.h.b16 %v247
    %v298 = vunpack.c.l.b16 %v248
    %v299 = vunpack.c.h.b16 %v248
    %v300 = vunpack.c.l.b16 %v249
    %v301 = vunpack.c.h.b16 %v249
    %v302 = vunpack.c.l.b16 %v250
    %v303 = vunpack.c.h.b16 %v250
    %v304 = vunpack.c.l.b16 %v251
    %v305 = vunpack.c.h.b16 %v251
    %v306 = vunpack.c.l.b16 %v252
    %v307 = vunpack.c.h.b16 %v252
    %v308 = vunpack.c.l.b16 %v253
    %v309 = vunpack.c.h.b16 %v253
    %v310 = vunpack.c.l.b16 %v254
    %v311 = vunpack.c.h.b16 %v254
    %v312 = vunpack.c.l.b16 %v255
    %v313 = vunpack.c.h.b16 %v255
    %v314 = vunpack.c.l.b16 %v256
    %v315 = vunpack.c.h.b16 %v256
    %v316 = vunpack.c.l.b16 %v257
    %v317 = vunpack.c.h.b16 %v257
    %v318 = vpack.c.b16 %v288, %v286
    %v319 = vpack.c.b16 %v289, %v287
    %v320 = vpack.c.b16 %v292, %v290
    %v321 = vpack.c.b16 %v293, %v291
    %v322 = vpack.c.b16 %v296, %v294
    %v323 = vpack.c.b16 %v297, %v295
    %v324 = vpack.c.b16 %v300, %v298
    %v325 = vpack.c.b16 %v301, %v299
    %v326 = vpack.c.b16 %v304, %v302
    %v327 = vpack.c.b16 %v305, %v303
    %v328 = vpack.c.b16 %v308, %v306
    %v329 = vpack.c.b16 %v309, %v307
    %v330 = vpack.c.b16 %v312, %v310
    %v331 = vpack.c.b16 %v313, %v311
    %v332 = vpack.c.b16 %v316, %v314
    %v333 = vpack.c.b16 %v317, %v315
    %350 = vmatprep.subr.bf16.mxu0 %v319
    %351 = vmatpush1.bf16.msra.mxu0 %v318
    %352 = vmatprep.subr.bf16.mxu0 %v321
    %353 = vmatpush1.bf16.msra.mxu0 %v320
    %354 = vmatprep.subr.bf16.mxu0 %v323
    %355 = vmatpush1.bf16.msra.mxu0 %v322
    %356 = vmatprep.subr.bf16.mxu0 %v325
    %357 = vmatpush1.bf16.msra.mxu0 %v324
    %358 = vmatprep.subr.bf16.mxu0 %v327
    %359 = vmatpush1.bf16.msra.mxu0 %v326
    %360 = vmatprep.subr.bf16.mxu0 %v329
    %361 = vmatpush1.bf16.msra.mxu0 %v328
    %362 = vmatprep.subr.bf16.mxu0 %v331
    %363 = vmatpush1.bf16.msra.mxu0 %v330
    %364 = vmatprep.subr.bf16.mxu0 %v333
    %365 = vmatpush1.bf16.msra.mxu0 %v332
    %366 = vmatprep.subr.bf16.mxu0 0
    %367 = vmatpush1.bf16.msra.mxu0 0
    %368 = vmatprep.subr.bf16.mxu0 0
    %369 = vmatpush1.bf16.msra.mxu0 0
    %370 = vmatprep.subr.bf16.mxu0 0
    %371 = vmatpush1.bf16.msra.mxu0 0
    %372 = vmatprep.subr.bf16.mxu0 0
    %373 = vmatpush1.bf16.msra.mxu0 0
    %374 = vmatprep.subr.bf16.mxu0 0
    %375 = vmatpush1.bf16.msra.mxu0 0
    %376 = vmatprep.subr.bf16.mxu0 0
    %377 = vmatpush1.bf16.msra.mxu0 0
    %378 = vmatprep.subr.bf16.mxu0 0
    %379 = vmatpush1.bf16.msra.mxu0 0
    %380 = vmatprep.subr.bf16.mxu0 0
    %381 = vmatpush1.bf16.msra.mxu0 0
    %382 = vmatprep.mubr.bf16.mxu0 0
    %383 = vmatmul.mubr.bf16.gmra.mrb[0].mxu0 %v117
    %v384 = vpop.f32.mrb[0].mxu0
    %v385 = vadd.f32 %v263, %v384
    %v386 = vpop.f32.mrb[0].mxu0
    %v387 = vadd.f32 %v267, %v386
    %v388 = vpop.f32.mrb[0].mxu0
    %v389 = vadd.f32 %v263, %v388
    %v390 = vpop.f32.mrb[0].mxu0
    %v391 = vadd.f32 %v267, %v390
    %392 = vdwg.mxu0
    %v393 = vmax.f32 %v234, 0.0
    %v394 = vmax.f32 %v236, 0.0
    %v395 = vmax.f32 %v238, 0.0
    %v396 = vmax.f32 %v240, 0.0
    %v397 = vmul.f32 %v393, %v385
    %v398 = vmul.f32 %v394, %v387
    %v399 = vmul.f32 %v395, %v389
    %v400 = vmul.f32 %v396, %v391
    %v401 = vpack.c.bf16 %v399, %v397
    %v402 = vpack.c.bf16 %v400, %v398
    %v403 = vld [vmem:[#allocation8] sm:$0xf]
    %v404 = vld [vmem:[#allocation8 + $0x4] sm:$0xf]
    %v405 = vld [vmem:[#allocation8 + $0x8] sm:$0xf]
    %v406 = vld [vmem:[#allocation8 + $0xc] sm:$0xf]
    %v407 = vld [vmem:[#allocation8 + $0x10] sm:$0xf]
    %v408 = vld [vmem:[#allocation8 + $0x14] sm:$0xf]
    %v409 = vld [vmem:[#allocation8 + $0x18] sm:$0xf]
    %v410 = vld [vmem:[#allocation8 + $0x1c] sm:$0xf]
    %v411 = vld [vmem:[#allocation8 + $0x20] sm:$0xf]
    %v412 = vld [vmem:[#allocation8 + $0x24] sm:$0xf]
    %v413 = vld [vmem:[#allocation8 + $0x28] sm:$0xf]
    %v414 = vld [vmem:[#allocation8 + $0x2c] sm:$0xf]
    %v415 = vld [vmem:[#allocation8 + $0x30] sm:$0xf]
    %v416 = vld [vmem:[#allocation8 + $0x34] sm:$0xf]
    %v417 = vld [vmem:[#allocation8 + $0x38] sm:$0xf]
    %v418 = vld [vmem:[#allocation8 + $0x3c] sm:$0xf]
    %v419 = vld [vmem:[#allocation8 + $0x40] sm:$0xf]
    %v420 = vld [vmem:[#allocation8 + $0x44] sm:$0xf]
    %v421 = vld [vmem:[#allocation8 + $0x48] sm:$0xf]
    %v422 = vld [vmem:[#allocation8 + $0x4c] sm:$0xf]
    %v423 = vld [vmem:[#allocation8 + $0x50] sm:$0xf]
    %v424 = vld [vmem:[#allocation8 + $0x54] sm:$0xf]
    %v425 = vld [vmem:[#allocation8 + $0x58] sm:$0xf]
    %v426 = vld [vmem:[#allocation8 + $0x5c] sm:$0xf]
    %v427 = vld [vmem:[#allocation8 + $0x60] sm:$0xf]
    %v428 = vld [vmem:[#allocation8 + $0x64] sm:$0xf]
    %v429 = vld [vmem:[#allocation8 + $0x68] sm:$0xf]
    %v430 = vld [vmem:[#allocation8 + $0x6c] sm:$0xf]
    %v431 = vld [vmem:[#allocation8 + $0x70] sm:$0xf]
    %v432 = vld [vmem:[#allocation8 + $0x74] sm:$0xf]
    %v433 = vld [vmem:[#allocation8 + $0x78] sm:$0xf]
    %v434 = vld [vmem:[#allocation8 + $0x7c] sm:$0xf]
    %v435 = vld [vmem:[%s6] sm:$0x1]
    %v437 = vlaneseq
    %v438 = vshrl.u32 %v437, 7
    %v439 = vsub.s32 0, %v438
    %v440 = vrot.slane %v435, %v439
    %v474 = vunpack.c.l.b16 %v403
    %v475 = vunpack.c.l.b16 %v404
    %v476 = vunpack.c.l.b16 %v405
    %v477 = vunpack.c.l.b16 %v406
    %v478 = vunpack.c.l.b16 %v407
    %v479 = vunpack.c.l.b16 %v408
    %v480 = vunpack.c.l.b16 %v409
    %v481 = vunpack.c.l.b16 %v410
    %v482 = vunpack.c.l.b16 %v411
    %v483 = vunpack.c.l.b16 %v412
    %v484 = vunpack.c.l.b16 %v413
    %v485 = vunpack.c.l.b16 %v414
    %v486 = vunpack.c.l.b16 %v415
    %v487 = vunpack.c.l.b16 %v416
    %v488 = vunpack.c.l.b16 %v417
    %v489 = vunpack.c.l.b16 %v418
    %v490 = vunpack.c.l.b16 %v419
    %v491 = vunpack.c.l.b16 %v420
    %v492 = vunpack.c.l.b16 %v421
    %v493 = vunpack.c.l.b16 %v422
    %v494 = vunpack.c.l.b16 %v423
    %v495 = vunpack.c.l.b16 %v424
    %v496 = vunpack.c.l.b16 %v425
    %v497 = vunpack.c.l.b16 %v426
    %v498 = vunpack.c.l.b16 %v427
    %v499 = vunpack.c.l.b16 %v428
    %v500 = vunpack.c.l.b16 %v429
    %v501 = vunpack.c.l.b16 %v430
    %v502 = vunpack.c.l.b16 %v431
    %v503 = vunpack.c.l.b16 %v432
    %v504 = vunpack.c.l.b16 %v433
    %v505 = vunpack.c.l.b16 %v434
    %v506 = vpack.c.b16 %v475, %v474
    %v507 = vpack.c.b16 %v477, %v476
    %v508 = vpack.c.b16 %v479, %v478
    %v509 = vpack.c.b16 %v481, %v480
    %v510 = vpack.c.b16 %v483, %v482
    %v511 = vpack.c.b16 %v485, %v484
    %v512 = vpack.c.b16 %v487, %v486
    %v513 = vpack.c.b16 %v489, %v488
    %v514 = vpack.c.b16 %v491, %v490
    %v515 = vpack.c.b16 %v493, %v492
    %v516 = vpack.c.b16 %v495, %v494
    %v517 = vpack.c.b16 %v497, %v496
    %v518 = vpack.c.b16 %v499, %v498
    %v519 = vpack.c.b16 %v501, %v500
    %v520 = vpack.c.b16 %v503, %v502
    %v521 = vpack.c.b16 %v505, %v504
    %538 = vmatprep.subr.bf16.mxu0 0
    %539 = vmatpush1.bf16.msra.mxu0 %v506
    %540 = vmatprep.subr.bf16.mxu0 0
    %541 = vmatpush1.bf16.msra.mxu0 %v507
    %542 = vmatprep.subr.bf16.mxu0 0
    %543 = vmatpush1.bf16.msra.mxu0 %v508
    %544 = vmatprep.subr.bf16.mxu0 0
    %545 = vmatpush1.bf16.msra.mxu0 %v509
    %546 = vmatprep.subr.bf16.mxu0 0
    %547 = vmatpush1.bf16.msra.mxu0 %v510
    %548 = vmatprep.subr.bf16.mxu0 0
    %549 = vmatpush1.bf16.msra.mxu0 %v511
    %550 = vmatprep.subr.bf16.mxu0 0
    %551 = vmatpush1.bf16.msra.mxu0 %v512
    %552 = vmatprep.subr.bf16.mxu0 0
    %553 = vmatpush1.bf16.msra.mxu0 %v513
    %554 = vmatprep.subr.bf16.mxu0 0
    %555 = vmatpush1.bf16.msra.mxu0 %v514
    %556 = vmatprep.subr.bf16.mxu0 0
    %557 = vmatpush1.bf16.msra.mxu0 %v515
    %558 = vmatprep.subr.bf16.mxu0 0
    %559 = vmatpush1.bf16.msra.mxu0 %v516
    %560 = vmatprep.subr.bf16.mxu0 0
    %561 = vmatpush1.bf16.msra.mxu0 %v517
    %562 = vmatprep.subr.bf16.mxu0 0
    %563 = vmatpush1.bf16.msra.mxu0 %v518
    %564 = vmatprep.subr.bf16.mxu0 0
    %565 = vmatpush1.bf16.msra.mxu0 %v519
    %566 = vmatprep.subr.bf16.mxu0 0
    %567 = vmatpush1.bf16.msra.mxu0 %v520
    %568 = vmatprep.subr.bf16.mxu0 0
    %569 = vmatpush1.bf16.msra.mxu0 %v521
    %570 = vmatprep.mubr.bf16.mxu0 %v402
    %571 = vmatmul.mubr.bf16.gmra.mrb[0].mxu0 %v401
    %v572 = vpop.f32.mrb[0].mxu0
    %v573 = vadd.f32 %v440, %v572
    %v574 = vpop.f32.mrb[0].mxu0
    %v575 = vpop.f32.mrb[0].mxu0
    %v576 = vadd.f32 %v440, %v575
    %v577 = vpop.f32.mrb[0].mxu0
    %578 = vdwg.mxu0
    %579 = vst [vmem:[#allocation10] sm:$0xff] %v573
    %580 = vst [vmem:[#allocation10 + $0x8] sm:$0xff] %v576
    // Predicated region
    $region46: #{tpu_custom_call.1} parent=1 // pred_check
      _
    $region47: #{tpu_custom_call.1} parent=1 // pred_check_branch
      %582 = sbr.rel (0) target = $region49
    $region48: #{tpu_custom_call.1} parent=1 // pred_region
      %s584 = ssub.s32 256, 256
      %585 = vsyncadd [#allocation4], %s584
      %s586 = sshll.u32 [#allocation10], 4
      %s587 = int_to_ptr.vmem [resolvable:$true] %s586
      %592 = dma.vmem_to_hbm [thread:$0]  %s587, 256, %s7, [#allocation4], 128, 128, 8
    $region49: #{tpu_custom_call.1} parent=1 // pred_fallthru
      _
    // Predicated region
    $region50: #{tpu_custom_call.1} parent=1 // pred_check
      _
    $region51: #{tpu_custom_call.1} parent=1 // pred_check_branch
      %594 = sbr.rel (0) target = $region53
    $region52: #{tpu_custom_call.1} parent=1 // pred_region
      %595 = dma.done [#allocation4], 256
    $region53: #{tpu_custom_call.1} parent=1 // pred_fallthru
      _
    %596 = vsyncpa [#allocation3], 1
    %597 = vsyncpa [#allocation6], 1
    %598 = vsyncpa [#allocation9], 1
    %599 = vsyncpa [#allocation4], 1

</llo_original>
